<compile_context>
chip_gen: v5e
topology: v5e:2x2
jax: 0.10.0
libtpu: 0.0.40
codegen_flags: <defaults>
</compile_context>

<pallas_src>
import jax
import jax.numpy as jnp
from jax.experimental import pallas as pl
from jax.experimental.pallas import tpu as pltpu


def _round_up(x: int, m: int) -> int:
    return ((x + m - 1) // m) * m


def two_layer_net_kernel(x_ref, w1_ref, b1_ref, w2_ref, b2_ref, o_ref):
    # fc1: x @ W1  -- bf16 operands, f32 accumulation on the MXU.
    h = jnp.dot(x_ref[...], w1_ref[...], preferred_element_type=jnp.float32)
    # Bias + ReLU epilogue in f32 on the VPU (keeps v5e happy: no bf16 VALU).
    h = jnp.maximum(h + b1_ref[...], 0.0)
    # fc2: relu(h) @ W2 -- cast the LHS back to bf16 to halve vreg footprint
    # and keep the MXU on its fast bf16 path; accumulate in f32.
    out = jnp.dot(h.astype(jnp.bfloat16), w2_ref[...],
                  preferred_element_type=jnp.float32)
    o_ref[...] = (out + b2_ref[...]).astype(o_ref.dtype)


def two_layer_net(x, w1, b1, w2, b2, *, tile_b=128):
    """Fused forward pass.

    x:  [B, D_in]   (f32)
    w1: [D_in, H]   (pre-transposed vs. PyTorch's [H, D_in])
    b1: [H] or [1, H]
    w2: [H, C]
    b2: [C] or [1, C]
    returns [B, C] in f32.
    """
    B, D_in = x.shape
    H = w1.shape[1]
    C = w2.shape[1]

    # Pad contraction / lane dims to multiples of 128 (lane-dense intermediate
    # + unmasked output stores) and the batch to a multiple of tile_b.
    D_pad = _round_up(D_in, 128)
    H_pad = _round_up(H, 128)
    C_pad = _round_up(C, 128)
    B_pad = _round_up(max(B, 1), tile_b)

    f32 = jnp.float32
    bf16 = jnp.bfloat16

    # Zero-padding preserves semantics exactly: padded x columns hit zero W1
    # rows, padded hidden units are relu(0 + 0) = 0, padded classes are sliced
    # off below.
    x_p = jnp.zeros((B_pad, D_pad), bf16).at[:B, :D_in].set(x.astype(bf16))
    w1_p = jnp.zeros((D_pad, H_pad), bf16).at[:D_in, :H].set(w1.astype(bf16))
    w2_p = jnp.zeros((H_pad, C_pad), bf16).at[:H, :C].set(w2.astype(bf16))
    b1_p = jnp.zeros((1, H_pad), f32).at[0, :H].set(b1.reshape(-1).astype(f32))
    b2_p = jnp.zeros((1, C_pad), f32).at[0, :C].set(b2.reshape(-1).astype(f32))

    grid = (B_pad // tile_b,)

    # VMEM budget: double-buffered x/out tiles + (resident) weights & biases.
    need = (2 * (tile_b * D_pad * 2 + tile_b * C_pad * 4)
            + 2 * ((D_pad * H_pad + H_pad * C_pad) * 2 + (H_pad + C_pad) * 4))
    vmem_limit = max(need + (4 << 20), 32 << 20)

    cost = pl.CostEstimate(
        flops=2 * B_pad * D_pad * H_pad + 2 * B_pad * H_pad * C_pad,
        transcendentals=0,
        bytes_accessed=(x_p.size * 2 + w1_p.size * 2 + w2_p.size * 2
                        + b1_p.size * 4 + b2_p.size * 4 + B_pad * C_pad * 4),
    )

    out_padded = pl.pallas_call(
        two_layer_net_kernel,
        out_shape=jax.ShapeDtypeStruct((B_pad, C_pad), f32),
        grid_spec=pl.GridSpec(
            grid=grid,
            in_specs=[
                pl.BlockSpec((tile_b, D_pad), lambda i: (i, 0)),  # x tile
                pl.BlockSpec((D_pad, H_pad), lambda i: (0, 0)),   # W1 (resident)
                pl.BlockSpec((1, H_pad), lambda i: (0, 0)),       # b1
                pl.BlockSpec((H_pad, C_pad), lambda i: (0, 0)),   # W2 (resident)
                pl.BlockSpec((1, C_pad), lambda i: (0, 0)),       # b2
            ],
            out_specs=pl.BlockSpec((tile_b, C_pad), lambda i: (i, 0)),
        ),
        compiler_params=pltpu.CompilerParams(
            dimension_semantics=("parallel",),
            vmem_limit_bytes=vmem_limit,
        ),
        cost_estimate=cost,
    )(x_p, w1_p, b1_p, w2_p, b2_p)

    # TODO(synk): for very large D_in/H (weights that blow the v7x 64 MiB VMEM)
    # add a reduction grid axis over D_in with a VMEM f32 accumulator instead
    # of keeping both weight matrices fully resident.
    return out_padded[:B, :C]


if __name__ == "__main__":
    # Small shapes consistent with the module: Linear(input_size, hidden_size),
    # Linear(hidden_size, num_classes). Ragged batch exercises the padding path
    # and pads to 256 -> grid of length 2 (feeds both v7x TensorCores).
    batch = 200
    input_size = 32
    hidden_size = 64
    num_classes = 16

    key = jax.random.PRNGKey(0)
    kx, kw1, kb1, kw2, kb2 = jax.random.split(key, 5)

    x = jax.random.normal(kx, (batch, input_size), dtype=jnp.float32)

    # Deterministic parameter init (mimics PyTorch Linear's
    # uniform(-1/sqrt(fan_in), 1/sqrt(fan_in)) scale).
    s1 = 1.0 / jnp.sqrt(jnp.float32(input_size))
    s2 = 1.0 / jnp.sqrt(jnp.float32(hidden_size))
    w1 = jax.random.uniform(kw1, (input_size, hidden_size), jnp.float32, -s1, s1)
    b1 = jax.random.uniform(kb1, (hidden_size,), jnp.float32, -s1, s1)
    w2 = jax.random.uniform(kw2, (hidden_size, num_classes), jnp.float32, -s2, s2)
    b2 = jax.random.uniform(kb2, (num_classes,), jnp.float32, -s2, s2)

    out = two_layer_net(x, w1, b1, w2, b2)
    out = jax.block_until_ready(out)

    # Pure-JAX f32 reference of the same semantics. The kernel feeds the MXU
    # bf16 operands (f32 accumulation), so compare with a loosened tolerance.
    ref = jnp.maximum(x @ w1 + b1[None, :], 0.0) @ w2 + b2[None, :]
    assert out.shape == (batch, num_classes)
    assert jnp.allclose(out, ref, atol=3e-2, rtol=3e-2), (
        f"max abs err {jnp.max(jnp.abs(out - ref))}")

    print("KERNEL_OK")
</pallas_src>

<mosaic_0001>
module attributes {stable_mosaic.version = 11 : i64} {
  func.func @two_layer_net_kernel(%arg0: i32, %arg1: memref<128x128xbf16, #tpu.memory_space<vmem>>, %arg2: memref<128x128xbf16, #tpu.memory_space<vmem>>, %arg3: memref<1x128xf32, #tpu.memory_space<vmem>>, %arg4: memref<128x128xbf16, #tpu.memory_space<vmem>>, %arg5: memref<1x128xf32, #tpu.memory_space<vmem>>, %arg6: memref<128x128xf32, #tpu.memory_space<vmem>>) attributes {dimension_semantics = [#tpu.dimension_semantics<parallel>], iteration_bounds = array<i64: 2>, scalar_prefetch = 0 : i64, scratch_operands = 0 : i64, tpu.core_type = #tpu.core_type<tc>, window_params = [{transform_indices = @transform_0, window_bounds = array<i64: 128, 128>}, {pipeline_mode = #tpu.pipeline_mode<synchronous>, transform_indices = @transform_1, window_bounds = array<i64: 128, 128>}, {pipeline_mode = #tpu.pipeline_mode<synchronous>, transform_indices = @transform_2, window_bounds = array<i64: 1, 128>}, {pipeline_mode = #tpu.pipeline_mode<synchronous>, transform_indices = @transform_3, window_bounds = array<i64: 128, 128>}, {pipeline_mode = #tpu.pipeline_mode<synchronous>, transform_indices = @transform_4, window_bounds = array<i64: 1, 128>}, {transform_indices = @transform_5, window_bounds = array<i64: 128, 128>}]} {
    %c0 = arith.constant 0 : index
    %c0_0 = arith.constant 0 : index
    %0 = vector.load %arg1[%c0, %c0_0] : memref<128x128xbf16, #tpu.memory_space<vmem>>, vector<128x128xbf16>
    %c0_1 = arith.constant 0 : index
    %c0_2 = arith.constant 0 : index
    %1 = vector.load %arg2[%c0_1, %c0_2] : memref<128x128xbf16, #tpu.memory_space<vmem>>, vector<128x128xbf16>
    %cst = arith.constant dense<0.000000e+00> : vector<128x128xf32>
    %2 = tpu.matmul %0, %1, %cst {dimension_numbers = #tpu.dot_dimension_numbers<[1], [0], [0], [1], [0, 0, 1, 1], [], []>} : vector<128x128xbf16>, vector<128x128xbf16>, vector<128x128xf32> -> vector<128x128xf32>
    %c0_3 = arith.constant 0 : index
    %c0_4 = arith.constant 0 : index
    %3 = vector.load %arg3[%c0_3, %c0_4] : memref<1x128xf32, #tpu.memory_space<vmem>>, vector<1x128xf32>
    %4 = vector.broadcast %3 : vector<1x128xf32> to vector<128x128xf32>
    %5 = arith.addf %2, %4 : vector<128x128xf32>
    %cst_5 = arith.constant 0.000000e+00 : f32
    %6 = vector.broadcast %cst_5 : f32 to vector<128x128xf32>
    %7 = arith.maximumf %5, %6 : vector<128x128xf32>
    %8 = arith.truncf %7 : vector<128x128xf32> to vector<128x128xbf16>
    %c0_6 = arith.constant 0 : index
    %c0_7 = arith.constant 0 : index
    %9 = vector.load %arg4[%c0_6, %c0_7] : memref<128x128xbf16, #tpu.memory_space<vmem>>, vector<128x128xbf16>
    %cst_8 = arith.constant dense<0.000000e+00> : vector<128x128xf32>
    %10 = tpu.matmul %8, %9, %cst_8 {dimension_numbers = #tpu.dot_dimension_numbers<[1], [0], [0], [1], [0, 0, 1, 1], [], []>} : vector<128x128xbf16>, vector<128x128xbf16>, vector<128x128xf32> -> vector<128x128xf32>
    %c0_9 = arith.constant 0 : index
    %c0_10 = arith.constant 0 : index
    %11 = vector.load %arg5[%c0_9, %c0_10] : memref<1x128xf32, #tpu.memory_space<vmem>>, vector<1x128xf32>
    %12 = vector.broadcast %11 : vector<1x128xf32> to vector<128x128xf32>
    %13 = arith.addf %10, %12 : vector<128x128xf32>
    %c0_11 = arith.constant 0 : index
    %c0_12 = arith.constant 0 : index
    %14 = vector.load %arg6[%c0_11, %c0_12] : memref<128x128xf32, #tpu.memory_space<vmem>>, vector<128x128xf32>
    tpu.vector_store %arg6[%c0_11, %c0_12], %13 {strides = array<i32>} : memref<128x128xf32, #tpu.memory_space<vmem>>, vector<128x128xf32>,
    return
  }
  func.func @transform_0(%arg0: i32) -> (i32, i32) {
    %c0_i32 = arith.constant 0 : i32
    %c0_i32_0 = arith.constant 0 : i32
    return %arg0, %c0_i32 : i32, i32
  }
  func.func @transform_1(%arg0: i32) -> (i32, i32) {
    %c0_i32 = arith.constant 0 : i32
    %c0_i32_0 = arith.constant 0 : i32
    %c0_i32_1 = arith.constant 0 : i32
    return %c0_i32, %c0_i32_0 : i32, i32
  }
  func.func @transform_2(%arg0: i32) -> (i32, i32) {
    %c0_i32 = arith.constant 0 : i32
    %c0_i32_0 = arith.constant 0 : i32
    %c0_i32_1 = arith.constant 0 : i32
    return %c0_i32, %c0_i32_0 : i32, i32
  }
  func.func @transform_3(%arg0: i32) -> (i32, i32) {
    %c0_i32 = arith.constant 0 : i32
    %c0_i32_0 = arith.constant 0 : i32
    %c0_i32_1 = arith.constant 0 : i32
    return %c0_i32, %c0_i32_0 : i32, i32
  }
  func.func @transform_4(%arg0: i32) -> (i32, i32) {
    %c0_i32 = arith.constant 0 : i32
    %c0_i32_0 = arith.constant 0 : i32
    %c0_i32_1 = arith.constant 0 : i32
    return %c0_i32, %c0_i32_0 : i32, i32
  }
  func.func @transform_5(%arg0: i32) -> (i32, i32) {
    %c0_i32 = arith.constant 0 : i32
    %c0_i32_0 = arith.constant 0 : i32
    return %arg0, %c0_i32 : i32, i32
  }
}

</mosaic_0001>

<llo_original>
// kernel: tpu_custom_call.1
$region0: #{tpu_custom_call.1}
  #allocation0 [shape = 'u32[]', space=smem, size = 0x4, offset = 0x4, fixed_abs, tag = 'smem constant byte address 0x4 - core index']
  #allocation1 [shape = 'u32[72,128]{1,0:T(1,128)}', space=vmem, size = 0x9000, scoped, tag = 'internal scratch']
  %s0 = inlined_call_operand.hbm [shape: bf16[256,128], index: 0, kind: input, shape index: {}]
  %s1 = inlined_call_operand.hbm [shape: bf16[128,128], index: 1, kind: input, shape index: {}]
  %s2 = inlined_call_operand.vmem [shape: f32[1,128], index: 2, kind: input, shape index: {}]
  %s3 = inlined_call_operand.hbm [shape: bf16[128,128], index: 3, kind: input, shape index: {}]
  %s4 = inlined_call_operand.vmem [shape: f32[1,128], index: 4, kind: input, shape index: {}]
  %s5 = inlined_call_operand.hbm [shape: f32[256,128], index: 5, kind: output, shape index: {}]
  %s6 = sld [smem:[#allocation0]]
  $region65: #{tpu_custom_call.1} parent=0
    _
  %s8 = ssub.s32 1, %s6
  %s9 = scalar_select 0, %s8, %s6
  $region1: #{tpu_custom_call.1} parent=0
    #allocation2 [shape = 'u8[65536]{0}', space=vmem, size = 0x10000, scoped, tag = 'input window, operand 0']
    #allocation3 [shape = 's32[2]{0}', space=sflag, size = 0x8, scoped, tag = 'scoped memory for tpu_custom_call.1']
    #allocation4 [shape = 's32[2]{0}', space=sflag, size = 0x8, scoped, tag = 'scoped memory for tpu_custom_call.1']
    #allocation5 [shape = 'u8[32768]{0}', space=vmem, size = 0x8000, scoped, tag = 'input window, operand 1, single buffered']
    #allocation6 [shape = 's32[1]{0}', space=sflag, size = 0x4, scoped, tag = 'scoped memory for tpu_custom_call.1']
    #allocation7 [shape = 'u8[32768]{0}', space=vmem, size = 0x8000, scoped, tag = 'input window, operand 3, single buffered']
    #allocation8 [shape = 'u8[131072]{0}', space=vmem, size = 0x20000, scoped, tag = 'output window, operand 0']
    %10 = vsyncpa [#allocation3], 0
    %s11 = scalar_lea.sflag [#allocation3], 1
    %12 = vsyncpa %s11, 0
    %13 = vsyncpa [#allocation6], 0
    %14 = vsyncpa [#allocation4], 0
    %s15 = scalar_lea.sflag [#allocation4], 1
    %16 = vsyncpa %s15, 0
    loop: start=0, step=1, limit=4
    $region2: #{tpu_custom_call.1} parent=1 // loop_pre_header
      _
    $region3: #{tpu_custom_call.1} parent=1 // loop_header
      %s18 = sphi 0, %s22
      %p19 = scmp.ge.s32.totalorder %s18, 4
      %s28 = sphi 0, %s30
      %s31 = sphi 0, %s28
      %s32 = sphi 0, %s31
      %s48 = sphi 0, %s32
      %s52 = sphi 0, %s52
      %s54 = sphi 0, %s52
      %s55 = sphi 0, %s54
      %s69 = sphi 0, %s55
      %s73 = sphi 0, %s73
      %s75 = sphi 0, %s73
      %s76 = sphi 0, %s75
      %s90 = sphi 0, %s76
      %s94 = sphi 0, %s94
      %s96 = sphi 0, %s94
      %s97 = sphi 0, %s96
      %s111 = sphi 0, %s97
      %s115 = sphi 0, %s115
      %s117 = sphi 0, %s115
      %s118 = sphi 0, %s117
      %s132 = sphi 0, %s118
      %s138 = sphi 0, %s140
      %s141 = sphi 0, %s138
      %s142 = sphi 0, %s141
      %s158 = sphi 0, %s142
    $region4: #{tpu_custom_call.1} parent=1 // loop_header_branch
      %21 = sbr.rel (%p19) target = $region8
    $region5: #{tpu_custom_call.1} parent=1 // loop_body
      %s23 = ssub.s32 %s18, 1
      %s24 = ssub.s32 %s18, 2
      %s25 = sadd.s32 %s18, 1
      %s26 = ssub.s32 %s18, %s25
      %p27 = scmp.eq.s32.totalorder %s26, 0
      %s29 = sadd.s32 %s28, 1
      %s30 = scalar_select %p27, %s28, %s29
      %p33 = pneg %p27
      %p34 = scmp.eq.s32.totalorder %s18, 1
      %p35 = por %p33, %p34
      %p36 = scmp.ne.s32.totalorder %s28, %s31
      %p37 = scmp.eq.s32.totalorder %s18, 0
      %p38 = por %p36, %p37
      %p39 = scmp.ne.s32.totalorder %s28, %s31
      %p40 = scmp.eq.s32.totalorder %s23, 1
      %p41 = por %p39, %p40
      %p42 = scmp.ne.s32.totalorder %s31, %s32
      %p43 = scmp.eq.s32.totalorder %s23, 0
      %p44 = por %p42, %p43
      %p45 = scmp.ne.s32.totalorder %s31, %s32
      %p46 = scmp.eq.s32.totalorder %s24, 1
      %p47 = por %p45, %p46
      %p49 = scmp.ne.s32.totalorder %s32, %s48
      %p50 = scmp.eq.s32.totalorder %s24, 0
      %p51 = por %p49, %p50
      %s53 = sadd.s32 %s52, 1
      %p56 = scmp.eq.s32.totalorder %s18, 1
      %p57 = scmp.ne.s32.totalorder %s52, %s54
      %p58 = scmp.eq.s32.totalorder %s18, 0
      %p59 = por %p57, %p58
      %p60 = scmp.ne.s32.totalorder %s52, %s54
      %p61 = scmp.eq.s32.totalorder %s23, 1
      %p62 = por %p60, %p61
      %p63 = scmp.ne.s32.totalorder %s54, %s55
      %p64 = scmp.eq.s32.totalorder %s23, 0
      %p65 = por %p63, %p64
      %p66 = scmp.ne.s32.totalorder %s54, %s55
      %p67 = scmp.eq.s32.totalorder %s24, 1
      %p68 = por %p66, %p67
      %p70 = scmp.ne.s32.totalorder %s55, %s69
      %p71 = scmp.eq.s32.totalorder %s24, 0
      %p72 = por %p70, %p71
      %s74 = sadd.s32 %s73, 1
      %p77 = scmp.eq.s32.totalorder %s18, 1
      %p78 = scmp.ne.s32.totalorder %s73, %s75
      %p79 = scmp.eq.s32.totalorder %s18, 0
      %p80 = por %p78, %p79
      %p81 = scmp.ne.s32.totalorder %s73, %s75
      %p82 = scmp.eq.s32.totalorder %s23, 1
      %p83 = por %p81, %p82
      %p84 = scmp.ne.s32.totalorder %s75, %s76
      %p85 = scmp.eq.s32.totalorder %s23, 0
      %p86 = por %p84, %p85
      %p87 = scmp.ne.s32.totalorder %s75, %s76
      %p88 = scmp.eq.s32.totalorder %s24, 1
      %p89 = por %p87, %p88
      %p91 = scmp.ne.s32.totalorder %s76, %s90
      %p92 = scmp.eq.s32.totalorder %s24, 0
      %p93 = por %p91, %p92
      %s95 = sadd.s32 %s94, 1
      %p98 = scmp.eq.s32.totalorder %s18, 1
      %p99 = scmp.ne.s32.totalorder %s94, %s96
      %p100 = scmp.eq.s32.totalorder %s18, 0
      %p101 = por %p99, %p100
      %p102 = scmp.ne.s32.totalorder %s94, %s96
      %p103 = scmp.eq.s32.totalorder %s23, 1
      %p104 = por %p102, %p103
      %p105 = scmp.ne.s32.totalorder %s96, %s97
      %p106 = scmp.eq.s32.totalorder %s23, 0
      %p107 = por %p105, %p106
      %p108 = scmp.ne.s32.totalorder %s96, %s97
      %p109 = scmp.eq.s32.totalorder %s24, 1
      %p110 = por %p108, %p109
      %p112 = scmp.ne.s32.totalorder %s97, %s111
      %p113 = scmp.eq.s32.totalorder %s24, 0
      %p114 = por %p112, %p113
      %s116 = sadd.s32 %s115, 1
      %p119 = scmp.eq.s32.totalorder %s18, 1
      %p120 = scmp.ne.s32.totalorder %s115, %s117
      %p121 = scmp.eq.s32.totalorder %s18, 0
      %p122 = por %p120, %p121
      %p123 = scmp.ne.s32.totalorder %s115, %s117
      %p124 = scmp.eq.s32.totalorder %s23, 1
      %p125 = por %p123, %p124
      %p126 = scmp.ne.s32.totalorder %s117, %s118
      %p127 = scmp.eq.s32.totalorder %s23, 0
      %p128 = por %p126, %p127
      %p129 = scmp.ne.s32.totalorder %s117, %s118
      %p130 = scmp.eq.s32.totalorder %s24, 1
      %p131 = por %p129, %p130
      %p133 = scmp.ne.s32.totalorder %s118, %s132
      %p134 = scmp.eq.s32.totalorder %s24, 0
      %p135 = por %p133, %p134
      %s136 = ssub.s32 %s18, %s25
      %p137 = scmp.eq.s32.totalorder %s136, 0
      %s139 = sadd.s32 %s138, 1
      %s140 = scalar_select %p137, %s138, %s139
      %p143 = pneg %p137
      %p144 = scmp.eq.s32.totalorder %s18, 1
      %p145 = por %p143, %p144
      %p146 = scmp.ne.s32.totalorder %s138, %s141
      %p147 = scmp.eq.s32.totalorder %s18, 0
      %p148 = por %p146, %p147
      %p149 = scmp.ne.s32.totalorder %s138, %s141
      %p150 = scmp.eq.s32.totalorder %s23, 1
      %p151 = por %p149, %p150
      %p152 = scmp.ne.s32.totalorder %s141, %s142
      %p153 = scmp.eq.s32.totalorder %s23, 0
      %p154 = por %p152, %p153
      %p155 = scmp.ne.s32.totalorder %s141, %s142
      %p156 = scmp.eq.s32.totalorder %s24, 1
      %p157 = por %p155, %p156
      %p159 = scmp.ne.s32.totalorder %s142, %s158
      %p160 = scmp.eq.s32.totalorder %s24, 0
      %p161 = por %p159, %p160
      %p162 = scmp.le.s32.totalorder 1, %s18
      %p163 = scmp.lt.s32.totalorder %s18, 3
      %p164 = pnand %p162, %p163
      %p165 = pneg %p164
      // Predicated region
      $region9: #{tpu_custom_call.1} parent=5 // pred_check
        _
      $region10: #{tpu_custom_call.1} parent=5 // pred_check_branch
        %167 = sbr.rel (%p164) target = $region12
      $region11: #{tpu_custom_call.1} parent=5 // pred_region
        %s168 = ssub.s32 %s18, 1
        // Predicated region
        $region13: #{tpu_custom_call.1} parent=11 // pred_check
          %p169 = pneg %p65
        $region14: #{tpu_custom_call.1} parent=11 // pred_check_branch
          %171 = sbr.rel (%p169) target = $region16
        $region15: #{tpu_custom_call.1} parent=11 // pred_region
          %173 = vsyncadd [#allocation6], 0
          %s174 = sshll.u32 %s1, 4
          %s175 = int_to_ptr.hbm [resolvable:$true] %s174
          %s176 = sshll.u32 [#allocation5], 4
          %s177 = int_to_ptr.vmem [resolvable:$true] %s176
          %182 = dma.hbm_to_vmem [thread:$0]  %s175, 1024, %s177, [#allocation6], 64, 64, 4
        $region16: #{tpu_custom_call.1} parent=11 // pred_fallthru
          _
        // Predicated region
        $region17: #{tpu_custom_call.1} parent=11 // pred_check
          %p183 = pneg %p86
        $region18: #{tpu_custom_call.1} parent=11 // pred_check_branch
          %185 = sbr.rel (%p183) target = $region20
        $region19: #{tpu_custom_call.1} parent=11 // pred_region
          _
        $region20: #{tpu_custom_call.1} parent=11 // pred_fallthru
          _
        // Predicated region
        $region21: #{tpu_custom_call.1} parent=11 // pred_check
          %p186 = pneg %p107
        $region22: #{tpu_custom_call.1} parent=11 // pred_check_branch
          %188 = sbr.rel (%p186) target = $region24
        $region23: #{tpu_custom_call.1} parent=11 // pred_region
          %190 = vsyncadd [#allocation6], 0
          %s191 = sshll.u32 %s3, 4
          %s192 = int_to_ptr.hbm [resolvable:$true] %s191
          %s193 = sshll.u32 [#allocation7], 4
          %s194 = int_to_ptr.vmem [resolvable:$true] %s193
          %199 = dma.hbm_to_vmem [thread:$0]  %s192, 1024, %s194, [#allocation6], 64, 64, 4
        $region24: #{tpu_custom_call.1} parent=11 // pred_fallthru
          _
        // Predicated region
        $region25: #{tpu_custom_call.1} parent=11 // pred_check
          %p200 = pneg %p128
        $region26: #{tpu_custom_call.1} parent=11 // pred_check_branch
          %202 = sbr.rel (%p200) target = $region28
        $region27: #{tpu_custom_call.1} parent=11 // pred_region
          _
        $region28: #{tpu_custom_call.1} parent=11 // pred_fallthru
          _
      $region12: #{tpu_custom_call.1} parent=5 // pred_fallthru
        _
      %p203 = scmp.lt.s32.totalorder %s18, 2
      // Predicated region
      $region29: #{tpu_custom_call.1} parent=5 // pred_check
        %p204 = pneg %p203
      $region30: #{tpu_custom_call.1} parent=5 // pred_check_branch
        %206 = sbr.rel (%p204) target = $region32
      $region31: #{tpu_custom_call.1} parent=5 // pred_region
        // Predicated region
        $region33: #{tpu_custom_call.1} parent=31 // pred_check
          %p207 = pneg %p38
        $region34: #{tpu_custom_call.1} parent=31 // pred_check_branch
          %209 = sbr.rel (%p207) target = $region36
        $region35: #{tpu_custom_call.1} parent=31 // pred_region
          %s210 = sand.u32 %s28, 1
          %s211 = scalar_lea.sflag [#allocation3], %s210
          %s212 = sand.u32 %s28, 1
          %s213 = smul.addr %s212, 64
          %s214 = scalar_lea.vmem [#allocation2], %s213
          %s215 = smul.u32 16, %s18
          %217 = vsyncadd %s211, 0
          %s218 = smul.addr %s215, 4
          %s219 = scalar_lea.hbm %s0, %s218
          %s220 = sshll.u32 %s219, 4
          %s221 = int_to_ptr.hbm [resolvable:$true] %s220
          %s222 = sshll.u32 %s214, 4
          %s223 = int_to_ptr.vmem [resolvable:$true] %s222
          %228 = dma.hbm_to_vmem [thread:$0]  %s221, 1024, %s223, %s211, 64, 64, 4
        $region36: #{tpu_custom_call.1} parent=31 // pred_fallthru
          _
      $region32: #{tpu_custom_call.1} parent=5 // pred_fallthru
        _
      %p229 = scmp.le.s32.totalorder 1, %s18
      %p230 = scmp.lt.s32.totalorder %s18, 3
      %p231 = pnand %p229, %p230
      %p232 = pneg %p231
      // Predicated region
      $region37: #{tpu_custom_call.1} parent=5 // pred_check
        _
      $region38: #{tpu_custom_call.1} parent=5 // pred_check_branch
        %234 = sbr.rel (%p231) target = $region40
      $region39: #{tpu_custom_call.1} parent=5 // pred_region
        %s235 = ssub.s32 %s18, 1
        %s236 = sand.u32 %s31, 1
        %s237 = scalar_lea.sflag [#allocation3], %s236
        %s238 = sand.u32 %s31, 1
        %s239 = smul.addr %s238, 64
        %s240 = scalar_lea.vmem [#allocation2], %s239
        // Predicated region
        $region41: #{tpu_custom_call.1} parent=39 // pred_check
          %p241 = pneg %p44
        $region42: #{tpu_custom_call.1} parent=39 // pred_check_branch
          %243 = sbr.rel (%p241) target = $region44
        $region43: #{tpu_custom_call.1} parent=39 // pred_region
          %245 = dma.done %s237, 1024
        $region44: #{tpu_custom_call.1} parent=39 // pred_fallthru
          _
        // Predicated region
        $region45: #{tpu_custom_call.1} parent=39 // pred_check
          %p246 = pneg %p65
        $region46: #{tpu_custom_call.1} parent=39 // pred_check_branch
          %248 = sbr.rel (%p246) target = $region48
        $region47: #{tpu_custom_call.1} parent=39 // pred_region
          %250 = dma.done [#allocation6], 1024
        $region48: #{tpu_custom_call.1} parent=39 // pred_fallthru
          _
        // Predicated region
        $region49: #{tpu_custom_call.1} parent=39 // pred_check
          %p251 = pneg %p107
        $region50: #{tpu_custom_call.1} parent=39 // pred_check_branch
          %253 = sbr.rel (%p251) target = $region52
        $region51: #{tpu_custom_call.1} parent=39 // pred_region
          %255 = dma.done [#allocation6], 1024
        $region52: #{tpu_custom_call.1} parent=39 // pred_fallthru
          _
        %s256 = sand.u32 %s31, 1
        %s257 = scalar_lea.sflag [#allocation3], %s256
        %s258 = sand.u32 %s31, 1
        %s259 = smul.addr %s258, 64
        %s260 = scalar_lea.vmem [#allocation2], %s259
        %p261 = pneg %p44
        %p262 = pneg %p41
        %p263 = pneg %p65
        %p264 = pneg %p62
        %p265 = pneg %p86
        %p266 = pneg %p83
        %p267 = pneg %p107
        %p268 = pneg %p104
        %p269 = pneg %p128
        %p270 = pneg %p125
        %p271 = pneg %p154
        %p272 = pneg %p151
        %s273 = sand.u32 %s141, 1
        %s274 = scalar_lea.sflag [#allocation4], %s273
        %s275 = sand.u32 %s141, 1
        %s276 = smul.addr %s275, 128
        %s277 = scalar_lea.vmem [#allocation8], %s276
        %s278 = smul.u32 16, %s23
        %s279 = smul.u32 16, %s23
        %v280 = vld [vmem:[%s240] sm:$0xf]
        %v281 = vld [vmem:[%s240 + $0x4] sm:$0xf]
        %v282 = vld [vmem:[%s240 + $0x8] sm:$0xf]
        %v283 = vld [vmem:[%s240 + $0xc] sm:$0xf]
        %v284 = vld [vmem:[%s240 + $0x10] sm:$0xf]
        %v285 = vld [vmem:[%s240 + $0x14] sm:$0xf]
        %v286 = vld [vmem:[%s240 + $0x18] sm:$0xf]
        %v287 = vld [vmem:[%s240 + $0x1c] sm:$0xf]
        %v288 = vld [vmem:[%s240 + $0x20] sm:$0xf]
        %v289 = vld [vmem:[%s240 + $0x24] sm:$0xf]
        %v290 = vld [vmem:[%s240 + $0x28] sm:$0xf]
        %v291 = vld [vmem:[%s240 + $0x2c] sm:$0xf]
        %v292 = vld [vmem:[%s240 + $0x30] sm:$0xf]
        %v293 = vld [vmem:[%s240 + $0x34] sm:$0xf]
        %v294 = vld [vmem:[%s240 + $0x38] sm:$0xf]
        %v295 = vld [vmem:[%s240 + $0x3c] sm:$0xf]
        %v296 = vld [vmem:[#allocation5] sm:$0xf]
        %v297 = vld [vmem:[#allocation5 + $0x4] sm:$0xf]
        %v298 = vld [vmem:[#allocation5 + $0x8] sm:$0xf]
        %v299 = vld [vmem:[#allocation5 + $0xc] sm:$0xf]
        %v300 = vld [vmem:[#allocation5 + $0x10] sm:$0xf]
        %v301 = vld [vmem:[#allocation5 + $0x14] sm:$0xf]
        %v302 = vld [vmem:[#allocation5 + $0x18] sm:$0xf]
        %v303 = vld [vmem:[#allocation5 + $0x1c] sm:$0xf]
        %v304 = vld [vmem:[#allocation5 + $0x20] sm:$0xf]
        %v305 = vld [vmem:[#allocation5 + $0x24] sm:$0xf]
        %v306 = vld [vmem:[#allocation5 + $0x28] sm:$0xf]
        %v307 = vld [vmem:[#allocation5 + $0x2c] sm:$0xf]
        %v308 = vld [vmem:[#allocation5 + $0x30] sm:$0xf]
        %v309 = vld [vmem:[#allocation5 + $0x34] sm:$0xf]
        %v310 = vld [vmem:[#allocation5 + $0x38] sm:$0xf]
        %v311 = vld [vmem:[#allocation5 + $0x3c] sm:$0xf]
        %v312 = vld [vmem:[%s2] sm:$0x1]
        %v314 = vperm.slane %v312, 0
        %v332 = vunpack.c.l.b16 %v280
        %v333 = vunpack.c.l.b16 %v281
        %v334 = vunpack.c.l.b16 %v282
        %v335 = vunpack.c.l.b16 %v283
        %v336 = vunpack.c.l.b16 %v284
        %v337 = vunpack.c.l.b16 %v285
        %v338 = vunpack.c.l.b16 %v286
        %v339 = vunpack.c.l.b16 %v287
        %v340 = vunpack.c.l.b16 %v288
        %v341 = vunpack.c.l.b16 %v289
        %v342 = vunpack.c.l.b16 %v290
        %v343 = vunpack.c.l.b16 %v291
        %v344 = vunpack.c.l.b16 %v292
        %v345 = vunpack.c.l.b16 %v293
        %v346 = vunpack.c.l.b16 %v294
        %v347 = vunpack.c.l.b16 %v295
        %v348 = vpack.c.b16 %v333, %v332
        %v349 = vpack.c.b16 %v335, %v334
        %v350 = vpack.c.b16 %v337, %v336
        %v351 = vpack.c.b16 %v339, %v338
        %v352 = vpack.c.b16 %v341, %v340
        %v353 = vpack.c.b16 %v343, %v342
        %v354 = vpack.c.b16 %v345, %v344
        %v355 = vpack.c.b16 %v347, %v346
        %v380 = vunpack.c.l.b16 %v296
        %v381 = vunpack.c.l.b16 %v297
        %v382 = vunpack.c.l.b16 %v298
        %v383 = vunpack.c.l.b16 %v299
        %v384 = vunpack.c.l.b16 %v300
        %v385 = vunpack.c.l.b16 %v301
        %v386 = vunpack.c.l.b16 %v302
        %v387 = vunpack.c.l.b16 %v303
        %v388 = vunpack.c.l.b16 %v304
        %v389 = vunpack.c.l.b16 %v305
        %v390 = vunpack.c.l.b16 %v306
        %v391 = vunpack.c.l.b16 %v307
        %v392 = vunpack.c.l.b16 %v308
        %v393 = vunpack.c.l.b16 %v309
        %v394 = vunpack.c.l.b16 %v310
        %v395 = vunpack.c.l.b16 %v311
        %v396 = vpack.c.b16 %v381, %v380
        %v397 = vpack.c.b16 %v383, %v382
        %v398 = vpack.c.b16 %v385, %v384
        %v399 = vpack.c.b16 %v387, %v386
        %v400 = vpack.c.b16 %v389, %v388
        %v401 = vpack.c.b16 %v391, %v390
        %v402 = vpack.c.b16 %v393, %v392
        %v403 = vpack.c.b16 %v395, %v394
        %412 = vmatpush.bf16.msra.mxu0 %v403
        %413 = vmatpush.bf16.msra.mxu0 %v402
        %414 = vmatpush.bf16.msra.mxu0 %v401
        %415 = vmatpush.bf16.msra.mxu0 %v400
        %416 = vmatpush.bf16.msra.mxu0 %v399
        %417 = vmatpush.bf16.msra.mxu0 %v398
        %418 = vmatpush.bf16.msra.mxu0 %v397
        %419 = vmatpush.bf16.msra.mxu0 %v396
        %420 = vmatmul.bf16.gmra.mxu0 %v348
        %v421 = vpop.f32.mrf.mxu0
        %v422 = vadd.f32 %v314, %v421
        %v423 = vpop.f32.mrf.mxu0
        %v424 = vadd.f32 %v314, %v423
        %425 = vmatmul.bf16.gmra.mxu0 %v349
        %v426 = vpop.f32.mrf.mxu0
        %v427 = vadd.f32 %v314, %v426
        %v428 = vpop.f32.mrf.mxu0
        %v429 = vadd.f32 %v314, %v428
        %430 = vmatmul.bf16.gmra.mxu0 %v350
        %v431 = vpop.f32.mrf.mxu0
        %v432 = vadd.f32 %v314, %v431
        %v433 = vpop.f32.mrf.mxu0
        %v434 = vadd.f32 %v314, %v433
        %435 = vmatmul.bf16.gmra.mxu0 %v351
        %v436 = vpop.f32.mrf.mxu0
        %v437 = vadd.f32 %v314, %v436
        %v438 = vpop.f32.mrf.mxu0
        %v439 = vadd.f32 %v314, %v438
        %440 = vmatmul.bf16.gmra.mxu0 %v352
        %v441 = vpop.f32.mrf.mxu0
        %v442 = vadd.f32 %v314, %v441
        %v443 = vpop.f32.mrf.mxu0
        %v444 = vadd.f32 %v314, %v443
        %445 = vmatmul.bf16.gmra.mxu0 %v353
        %v446 = vpop.f32.mrf.mxu0
        %v447 = vadd.f32 %v314, %v446
        %v448 = vpop.f32.mrf.mxu0
        %v449 = vadd.f32 %v314, %v448
        %450 = vmatmul.bf16.gmra.mxu0 %v354
        %v451 = vpop.f32.mrf.mxu0
        %v452 = vadd.f32 %v314, %v451
        %v453 = vpop.f32.mrf.mxu0
        %v454 = vadd.f32 %v314, %v453
        %455 = vmatmul.bf16.gmra.mxu0 %v355
        %v456 = vpop.f32.mrf.mxu0
        %v457 = vadd.f32 %v314, %v456
        %v458 = vpop.f32.mrf.mxu0
        %v459 = vadd.f32 %v314, %v458
        %460 = vdwg.mxu0
        %v461 = vmax.f32 %v422, 0.0
        %v462 = vmax.f32 %v424, 0.0
        %v463 = vmax.f32 %v427, 0.0
        %v464 = vmax.f32 %v429, 0.0
        %v465 = vmax.f32 %v432, 0.0
        %v466 = vmax.f32 %v434, 0.0
        %v467 = vmax.f32 %v437, 0.0
        %v468 = vmax.f32 %v439, 0.0
        %v469 = vmax.f32 %v442, 0.0
        %v470 = vmax.f32 %v444, 0.0
        %v471 = vmax.f32 %v447, 0.0
        %v472 = vmax.f32 %v449, 0.0
        %v473 = vmax.f32 %v452, 0.0
        %v474 = vmax.f32 %v454, 0.0
        %v475 = vmax.f32 %v457, 0.0
        %v476 = vmax.f32 %v459, 0.0
        %v477 = vpack.c.bf16 %v462, %v461
        %v478 = vpack.c.bf16 %v464, %v463
        %v479 = vpack.c.bf16 %v466, %v465
        %v480 = vpack.c.bf16 %v468, %v467
        %v481 = vpack.c.bf16 %v470, %v469
        %v482 = vpack.c.bf16 %v472, %v471
        %v483 = vpack.c.bf16 %v474, %v473
        %v484 = vpack.c.bf16 %v476, %v475
        %v485 = vld [vmem:[#allocation7] sm:$0xf]
        %v486 = vld [vmem:[#allocation7 + $0x4] sm:$0xf]
        %v487 = vld [vmem:[#allocation7 + $0x8] sm:$0xf]
        %v488 = vld [vmem:[#allocation7 + $0xc] sm:$0xf]
        %v489 = vld [vmem:[#allocation7 + $0x10] sm:$0xf]
        %v490 = vld [vmem:[#allocation7 + $0x14] sm:$0xf]
        %v491 = vld [vmem:[#allocation7 + $0x18] sm:$0xf]
        %v492 = vld [vmem:[#allocation7 + $0x1c] sm:$0xf]
        %v493 = vld [vmem:[#allocation7 + $0x20] sm:$0xf]
        %v494 = vld [vmem:[#allocation7 + $0x24] sm:$0xf]
        %v495 = vld [vmem:[#allocation7 + $0x28] sm:$0xf]
        %v496 = vld [vmem:[#allocation7 + $0x2c] sm:$0xf]
        %v497 = vld [vmem:[#allocation7 + $0x30] sm:$0xf]
        %v498 = vld [vmem:[#allocation7 + $0x34] sm:$0xf]
        %v499 = vld [vmem:[#allocation7 + $0x38] sm:$0xf]
        %v500 = vld [vmem:[#allocation7 + $0x3c] sm:$0xf]
        %v501 = vld [vmem:[%s4] sm:$0x1]
        %v503 = vperm.slane %v501, 0
        %v521 = vunpack.c.l.b16 %v485
        %v522 = vunpack.c.l.b16 %v486
        %v523 = vunpack.c.l.b16 %v487
        %v524 = vunpack.c.l.b16 %v488
        %v525 = vunpack.c.l.b16 %v489
        %v526 = vunpack.c.l.b16 %v490
        %v527 = vunpack.c.l.b16 %v491
        %v528 = vunpack.c.l.b16 %v492
        %v529 = vunpack.c.l.b16 %v493
        %v530 = vunpack.c.l.b16 %v494
        %v531 = vunpack.c.l.b16 %v495
        %v532 = vunpack.c.l.b16 %v496
        %v533 = vunpack.c.l.b16 %v497
        %v534 = vunpack.c.l.b16 %v498
        %v535 = vunpack.c.l.b16 %v499
        %v536 = vunpack.c.l.b16 %v500
        %v537 = vpack.c.b16 %v522, %v521
        %v538 = vpack.c.b16 %v524, %v523
        %v539 = vpack.c.b16 %v526, %v525
        %v540 = vpack.c.b16 %v528, %v527
        %v541 = vpack.c.b16 %v530, %v529
        %v542 = vpack.c.b16 %v532, %v531
        %v543 = vpack.c.b16 %v534, %v533
        %v544 = vpack.c.b16 %v536, %v535
        %553 = vmatpush.bf16.msra.mxu0 %v544
        %554 = vmatpush.bf16.msra.mxu0 %v543
        %555 = vmatpush.bf16.msra.mxu0 %v542
        %556 = vmatpush.bf16.msra.mxu0 %v541
        %557 = vmatpush.bf16.msra.mxu0 %v540
        %558 = vmatpush.bf16.msra.mxu0 %v539
        %559 = vmatpush.bf16.msra.mxu0 %v538
        %560 = vmatpush.bf16.msra.mxu0 %v537
        %561 = vmatmul.bf16.gmra.mxu0 %v477
        %v562 = vpop.f32.mrf.mxu0
        %v563 = vadd.f32 %v503, %v562
        %v564 = vpop.f32.mrf.mxu0
        %v565 = vadd.f32 %v503, %v564
        %566 = vmatmul.bf16.gmra.mxu0 %v478
        %v567 = vpop.f32.mrf.mxu0
        %v568 = vadd.f32 %v503, %v567
        %v569 = vpop.f32.mrf.mxu0
        %v570 = vadd.f32 %v503, %v569
        %571 = vmatmul.bf16.gmra.mxu0 %v479
        %v572 = vpop.f32.mrf.mxu0
        %v573 = vadd.f32 %v503, %v572
        %v574 = vpop.f32.mrf.mxu0
        %v575 = vadd.f32 %v503, %v574
        %576 = vmatmul.bf16.gmra.mxu0 %v480
        %v577 = vpop.f32.mrf.mxu0
        %v578 = vadd.f32 %v503, %v577
        %v579 = vpop.f32.mrf.mxu0
        %v580 = vadd.f32 %v503, %v579
        %581 = vmatmul.bf16.gmra.mxu0 %v481
        %v582 = vpop.f32.mrf.mxu0
        %v583 = vadd.f32 %v503, %v582
        %v584 = vpop.f32.mrf.mxu0
        %v585 = vadd.f32 %v503, %v584
        %586 = vmatmul.bf16.gmra.mxu0 %v482
        %v587 = vpop.f32.mrf.mxu0
        %v588 = vadd.f32 %v503, %v587
        %v589 = vpop.f32.mrf.mxu0
        %v590 = vadd.f32 %v503, %v589
        %591 = vmatmul.bf16.gmra.mxu0 %v483
        %v592 = vpop.f32.mrf.mxu0
        %v593 = vadd.f32 %v503, %v592
        %v594 = vpop.f32.mrf.mxu0
        %v595 = vadd.f32 %v503, %v594
        %596 = vmatmul.bf16.gmra.mxu0 %v484
        %v597 = vpop.f32.mrf.mxu0
        %v598 = vadd.f32 %v503, %v597
        %v599 = vpop.f32.mrf.mxu0
        %v600 = vadd.f32 %v503, %v599
        %601 = vdwg.mxu0
        %602 = vst [vmem:[%s277] sm:$0xff] %v563
        %603 = vst [vmem:[%s277 + $0x8] sm:$0xff] %v565
        %604 = vst [vmem:[%s277 + $0x10] sm:$0xff] %v568
        %605 = vst [vmem:[%s277 + $0x18] sm:$0xff] %v570
        %606 = vst [vmem:[%s277 + $0x20] sm:$0xff] %v573
        %607 = vst [vmem:[%s277 + $0x28] sm:$0xff] %v575
        %608 = vst [vmem:[%s277 + $0x30] sm:$0xff] %v578
        %609 = vst [vmem:[%s277 + $0x38] sm:$0xff] %v580
        %610 = vst [vmem:[%s277 + $0x40] sm:$0xff] %v583
        %611 = vst [vmem:[%s277 + $0x48] sm:$0xff] %v585
        %612 = vst [vmem:[%s277 + $0x50] sm:$0xff] %v588
        %613 = vst [vmem:[%s277 + $0x58] sm:$0xff] %v590
        %614 = vst [vmem:[%s277 + $0x60] sm:$0xff] %v593
        %615 = vst [vmem:[%s277 + $0x68] sm:$0xff] %v595
        %616 = vst [vmem:[%s277 + $0x70] sm:$0xff] %v598
        %617 = vst [vmem:[%s277 + $0x78] sm:$0xff] %v600
        %s618 = sand.u32 %s141, 1
        %s619 = scalar_lea.sflag [#allocation4], %s618
        %s620 = sand.u32 %s141, 1
        %s621 = smul.addr %s620, 128
        %s622 = scalar_lea.vmem [#allocation8], %s621
        // Predicated region
        $region53: #{tpu_custom_call.1} parent=39 // pred_check
          %p623 = pneg %p151
        $region54: #{tpu_custom_call.1} parent=39 // pred_check_branch
          %625 = sbr.rel (%p623) target = $region56
        $region55: #{tpu_custom_call.1} parent=39 // pred_region
          %s626 = smul.u32 16, %s23
          %628 = vsyncadd %s619, 0
          %s629 = smul.addr %s626, 8
          %s630 = scalar_lea.hbm %s5, %s629
          %s631 = sshll.u32 %s622, 4
          %s632 = int_to_ptr.vmem [resolvable:$true] %s631
          %s633 = sshll.u32 %s630, 4
          %s634 = int_to_ptr.hbm [resolvable:$true] %s633
          %639 = dma.vmem_to_hbm [thread:$0]  %s632, 2048, %s634, %s619, 128, 128, 8
        $region56: #{tpu_custom_call.1} parent=39 // pred_fallthru
          _
      $region40: #{tpu_custom_call.1} parent=5 // pred_fallthru
        _
      %p640 = scmp.le.s32.totalorder 2, %s18
      // Predicated region
      $region57: #{tpu_custom_call.1} parent=5 // pred_check
        %p641 = pneg %p640
      $region58: #{tpu_custom_call.1} parent=5 // pred_check_branch
        %643 = sbr.rel (%p641) target = $region60
      $region59: #{tpu_custom_call.1} parent=5 // pred_region
        %s644 = ssub.s32 %s18, 2
        // Predicated region
        $region61: #{tpu_custom_call.1} parent=59 // pred_check
          %p645 = pneg %p157
        $region62: #{tpu_custom_call.1} parent=59 // pred_check_branch
          %647 = sbr.rel (%p645) target = $region64
        $region63: #{tpu_custom_call.1} parent=59 // pred_region
          %s648 = sand.u32 %s142, 1
          %s649 = scalar_lea.sflag [#allocation4], %s648
          %s650 = sand.u32 %s142, 1
          %s651 = smul.addr %s650, 128
          %s652 = scalar_lea.vmem [#allocation8], %s651
          %654 = dma.done %s649, 2048
        $region64: #{tpu_custom_call.1} parent=59 // pred_fallthru
          _
      $region60: #{tpu_custom_call.1} parent=5 // pred_fallthru
        _
    $region6: #{tpu_custom_call.1} parent=1 // loop_footer
      %s22 = sadd.s32 1, %s18
    $region7: #{tpu_custom_call.1} parent=1 // loop_footer_branch
      %17 = sbr.rel target = $region3
    $region8: #{tpu_custom_call.1} parent=1 // loop_exit
      _
    %655 = vsyncpa [#allocation3], 1
    %s656 = scalar_lea.sflag [#allocation3], 1
    %657 = vsyncpa %s656, 1
    %658 = vsyncpa [#allocation6], 1
    %659 = vsyncpa [#allocation4], 1
    %s660 = scalar_lea.sflag [#allocation4], 1
    %661 = vsyncpa %s660, 1

</llo_original>
